<compile_context>
chip_gen: v6e
topology: v6e:2x2x1
jax: 0.10.0
libtpu: 0.0.40
codegen_flags: <defaults>
</compile_context>

<pallas_src>
import jax
import jax.numpy as jnp
from jax import lax
from jax.experimental import pallas as pl
from jax.experimental.pallas import tpu as pltpu


# ---------------------------------------------------------------------------
# VMEM sizing (generation aware)
# ---------------------------------------------------------------------------
def _vmem_budgets():
    """Returns (scoped vmem limit, per-grid-step block budget) in bytes.

    Physical VMEM: 128 MiB on v5e/v6e, 64 MiB on v7x.  We request at most
    64 MiB of scoped VMEM (75% of physical on v7x -> ~48 MiB) and budget ~40%
    of that for the per-step blocks: each input block and the output block is
    double-buffered by the pipeline, so 2x blocks must fit with headroom.
    """
    try:
        phys = int(pltpu.get_tpu_info().vmem_capacity_bytes)
    except Exception:   # no TPU info available: be conservative (v7x-safe)
        phys = 64 * 1024 * 1024
    limit = min(64 * 1024 * 1024, (phys * 3) // 4)
    budget = (limit * 2) // 5
    return limit, budget


def _round_up(x, m):
    return ((x + m - 1) // m) * m


def _padded_tile_bytes(rows, cols, dtype):
    """VMEM footprint of a (rows, cols) tile including Mosaic lane/sublane padding."""
    itemsize = jnp.dtype(dtype).itemsize
    sublane = 8 * max(1, 4 // itemsize)   # f32: 8, bf16: 16, int8: 32
    return _round_up(rows, sublane) * _round_up(cols, 128) * itemsize


def _pick_row_tile(i, per_head_bytes_fn, budget):
    """Largest row tile (full extent preferred) whose single-head block fits the budget."""
    cands = [i] + [c for c in (512, 256, 128, 64, 32, 16, 8) if c < i and i % c == 0]
    for ti in cands:
        if per_head_bytes_fn(ti) <= budget:
            return ti
    # Even the smallest tile overflows the block budget (very long J): take the
    # smallest tile and rely on the vmem_limit headroom.
    # TODO(synk): tile the J axis as well for multi-thousand-token sequences (v7x).
    return cands[-1]


def _pick_head_block(bh, per_head_bytes, budget):
    """Heads per grid step: as many as fit the block budget (no artificial cap).

    Among fitting divisors of bh, prefer one giving an even number of leading
    grid steps (>= 2) so v7x's two TensorCores both get balanced work, but never
    at the cost of more than halving the block size.
    """
    fitting = [d for d in range(1, bh + 1)
               if bh % d == 0 and d * per_head_bytes <= budget]
    if not fitting:
        return 1
    d_max = max(fitting)
    if (bh // d_max) % 2 == 0:
        return d_max
    even = [d for d in fitting if (bh // d) % 2 == 0]
    if even and 2 * max(even) >= d_max:
        return max(even)
    return d_max


# ---------------------------------------------------------------------------
# Kernels
# ---------------------------------------------------------------------------
def _qk_kernel(q_ref, k_ref, o_ref):
    # q: (Hb, Ti, D), k: (Hb, J, D) -> o: (Hb, Ti, J); contract D, batch over heads.
    o_ref[...] = lax.dot_general(
        q_ref[...], k_ref[...],
        dimension_numbers=(((2,), (2,)), ((0,), (0,))),
        preferred_element_type=jnp.float32,
    ).astype(o_ref.dtype)


def _av_kernel(a_ref, v_ref, o_ref):
    # a: (Hb, Ti, J), v: (Hb, J, D) -> o: (Hb, Ti, D); contract J, batch over heads.
    o_ref[...] = lax.dot_general(
        a_ref[...], v_ref[...],
        dimension_numbers=(((2,), (1,)), ((0,), (0,))),
        preferred_element_type=jnp.float32,
    ).astype(o_ref.dtype)


def _av_packed_kernel(a_ref, v_ref, o_ref):
    # a: (Hg, Ti, J), v: (Hg, J, D) -> o: (1, Ti, Hg*D), heads packed along lanes.
    hg = a_ref.shape[0]
    d = v_ref.shape[2]
    for h in range(hg):   # static Python loop -> hg MXU matmuls, lane-dense out tile
        o_ref[0, :, h * d:(h + 1) * d] = jnp.dot(
            a_ref[h], v_ref[h], preferred_element_type=jnp.float32
        ).astype(o_ref.dtype)


# ---------------------------------------------------------------------------
# Wrappers
# ---------------------------------------------------------------------------
def _attention_einsum(kernel, x, y, out_minor):
    """Batched-matmul einsum: x (B,H,I,Kx), y (B,H,Jy,Ky) -> (B,H,I,out_minor)."""
    B, H, I, Kx = x.shape
    Jy, Ky = y.shape[2], y.shape[3]
    BH = B * H
    out_dtype = jnp.result_type(x.dtype, y.dtype)
    out_itemsize = jnp.dtype(out_dtype).itemsize

    # Flatten (B, H) -> BH (adjacent-dim merge, no data movement).
    xr = x.reshape(BH, I, Kx)
    yr = y.reshape(BH, Jy, Ky)

    vmem_limit, budget = _vmem_budgets()

    def per_head_bytes(ti):
        return (_padded_tile_bytes(ti, Kx, x.dtype)
                + _padded_tile_bytes(Jy, Ky, y.dtype)
                + _padded_tile_bytes(ti, out_minor, out_dtype))

    ti = _pick_row_tile(I, per_head_bytes, budget)
    hb = _pick_head_block(BH, per_head_bytes(ti), budget)

    # Grid order matters: the row-tile axis is innermost and the y (K/V) block
    # index does not depend on it, so Pallas keeps the y block resident across
    # row tiles (one HBM read per operand).  Do not reorder.
    grid = (BH // hb, I // ti)

    cost = pl.CostEstimate(
        flops=2 * BH * I * out_minor * Kx,
        transcendentals=0,
        bytes_accessed=int(x.size * x.dtype.itemsize
                           + y.size * y.dtype.itemsize
                           + BH * I * out_minor * out_itemsize),
    )

    out = pl.pallas_call(
        kernel,
        out_shape=jax.ShapeDtypeStruct((BH, I, out_minor), out_dtype),
        grid_spec=pltpu.PrefetchScalarGridSpec(
            num_scalar_prefetch=0,
            grid=grid,
            in_specs=[
                pl.BlockSpec((hb, ti, Kx), lambda g, r: (g, r, 0)),
                pl.BlockSpec((hb, Jy, Ky), lambda g, r: (g, 0, 0)),  # resident across r
            ],
            out_specs=pl.BlockSpec((hb, ti, out_minor), lambda g, r: (g, r, 0)),
        ),
        compiler_params=pltpu.CompilerParams(
            dimension_semantics=("parallel", "parallel"),
            vmem_limit_bytes=vmem_limit,
        ),
        cost_estimate=cost,
    )(xr, yr)
    return out.reshape(B, H, I, out_minor)


def _attention_av_packed(a, v):
    """attn @ V with heads packed along lanes: (B,H,I,J),(B,H,J,D) -> (B, I, H*D).

    Lane-dense output (minor dim H*D, a multiple of 128 per group) gives a dense
    HBM writeback and matches the 'b h n d -> b n (h d)' rearrange the ViT applies
    right after this einsum.
    """
    B, H, I, J = a.shape
    D = v.shape[3]
    BH = B * H
    out_dtype = jnp.result_type(a.dtype, v.dtype)

    ar = a.reshape(BH, I, J)
    vr = v.reshape(BH, J, D)

    vmem_limit, budget = _vmem_budgets()

    def group_bytes(ti, d):
        return (d * _padded_tile_bytes(ti, J, a.dtype)
                + d * _padded_tile_bytes(J, D, v.dtype)
                + _padded_tile_bytes(ti, d * D, out_dtype))

    ti = _pick_row_tile(I, lambda t: group_bytes(t, 1), budget)

    # Heads per group: must divide H, keep the packed minor dim lane-legal
    # (multiple of 128 or the full H*D extent) and fit the block budget.
    valid = [d for d in range(1, H + 1)
             if H % d == 0 and ((d * D) % 128 == 0 or d == H)
             and group_bytes(ti, d) <= budget]
    if not valid:
        # No legal lane-dense grouping fits: fall back to the standard layout
        # and rearrange outside the kernel (still correct, just not lane-dense).
        out = _attention_einsum(_av_kernel, a, v, out_minor=D)
        return out.transpose(0, 2, 1, 3).reshape(B, I, H * D)

    hg = max(valid)
    if (BH // hg) % 2 != 0:   # prefer an even leading-axis step count (v7x 2 TCs)
        even = [d for d in valid if (BH // d) % 2 == 0]
        if even and 2 * max(even) >= hg:
            hg = max(even)
    hpg = H // hg             # head-groups per batch element

    grid = (BH // hg, I // ti)

    cost = pl.CostEstimate(
        flops=2 * BH * I * D * J,
        transcendentals=0,
        bytes_accessed=int(a.size * a.dtype.itemsize + v.size * v.dtype.itemsize
                           + BH * I * D * jnp.dtype(out_dtype).itemsize),
    )

    out = pl.pallas_call(
        _av_packed_kernel,
        out_shape=jax.ShapeDtypeStruct((B, I, H * D), out_dtype),
        grid_spec=pltpu.PrefetchScalarGridSpec(
            num_scalar_prefetch=0,
            grid=grid,
            in_specs=[
                pl.BlockSpec((hg, ti, J), lambda g, r: (g, r, 0)),
                pl.BlockSpec((hg, J, D), lambda g, r: (g, 0, 0)),   # resident across r
            ],
            out_specs=pl.BlockSpec((1, ti, hg * D),
                                   lambda g, r: (g // hpg, r, g % hpg)),
        ),
        compiler_params=pltpu.CompilerParams(
            dimension_semantics=("parallel", "parallel"),
            vmem_limit_bytes=vmem_limit,
        ),
        cost_estimate=cost,
    )(ar, vr)
    return out


class Einsum:
    """Pallas port of the `einsum` nn.Module (forward only; relprop is autograd-based).

    packed_output=True (opt-in, 'bhij,bhjd->bhid' only) returns the lane-dense
    (B, I, H*D) layout the ViT needs next instead of torch.einsum's (B, H, I, D).
    """

    def __init__(self, equation, packed_output=False):
        self.equation = equation.replace(" ", "")
        self.packed_output = packed_output

    def __call__(self, *operands):
        eq = self.equation
        if eq == "bhid,bhjd->bhij":
            q, k = operands
            return _attention_einsum(_qk_kernel, q, k, out_minor=k.shape[2])
        if eq == "bhij,bhjd->bhid":
            a, v = operands
            if self.packed_output:
                return _attention_av_packed(a, v)
            return _attention_einsum(_av_kernel, a, v, out_minor=v.shape[3])
        # TODO(synk): arbitrary einsum equations have no single Pallas lowering;
        # only the two attention contractions used by the ViT run in Pallas.
        return jnp.einsum(eq, *operands)


if __name__ == "__main__":
    key = jax.random.PRNGKey(0)
    kq, kk, kv = jax.random.split(key, 3)
    B, H, S, D = 2, 4, 8, 32
    q = jax.random.normal(kq, (B, H, S, D), dtype=jnp.float32)
    k = jax.random.normal(kk, (B, H, S, D), dtype=jnp.float32)
    v = jax.random.normal(kv, (B, H, S, D), dtype=jnp.float32)

    score_einsum = Einsum("bhid,bhjd->bhij")
    out_einsum = Einsum("bhij,bhjd->bhid")
    out_einsum_packed = Einsum("bhij,bhjd->bhid", packed_output=True)

    scores = score_einsum(q, k)
    jax.block_until_ready(scores)
    ref_scores = jnp.einsum("bhid,bhjd->bhij", q, k)
    assert scores.shape == (B, H, S, S)
    assert jnp.allclose(scores, ref_scores, atol=1e-4, rtol=1e-4)

    attn = jax.nn.softmax(scores, axis=-1)
    out = out_einsum(attn, v)
    jax.block_until_ready(out)
    ref_out = jnp.einsum("bhij,bhjd->bhid", attn, v)
    assert out.shape == (B, H, S, D)
    assert jnp.allclose(out, ref_out, atol=1e-4, rtol=1e-4)

    packed = out_einsum_packed(attn, v)
    jax.block_until_ready(packed)
    ref_packed = ref_out.transpose(0, 2, 1, 3).reshape(B, S, H * D)
    assert packed.shape == (B, S, H * D)
    assert jnp.allclose(packed, ref_packed, atol=1e-4, rtol=1e-4)

    print("KERNEL_OK")
</pallas_src>

<mosaic_0001>
module attributes {stable_mosaic.version = 11 : i64} {
  func.func @_qk_kernel(%arg0: i32, %arg1: i32, %arg2: memref<4x8x32xf32, #tpu.memory_space<vmem>>, %arg3: memref<4x8x32xf32, #tpu.memory_space<vmem>>, %arg4: memref<4x8x8xf32, #tpu.memory_space<vmem>>) attributes {dimension_semantics = [#tpu.dimension_semantics<parallel>, #tpu.dimension_semantics<parallel>], iteration_bounds = array<i64: 2, 1>, scalar_prefetch = 0 : i64, scratch_operands = 0 : i64, tpu.core_type = #tpu.core_type<tc>, window_params = [{transform_indices = @transform_0, window_bounds = array<i64: 4, 8, 32>}, {transform_indices = @transform_1, window_bounds = array<i64: 4, 8, 32>}, {transform_indices = @transform_2, window_bounds = array<i64: 4, 8, 8>}]} {
    %c0 = arith.constant 0 : index
    %c0_0 = arith.constant 0 : index
    %c0_1 = arith.constant 0 : index
    %0 = vector.load %arg2[%c0, %c0_0, %c0_1] : memref<4x8x32xf32, #tpu.memory_space<vmem>>, vector<4x8x32xf32>
    %c0_2 = arith.constant 0 : index
    %c0_3 = arith.constant 0 : index
    %c0_4 = arith.constant 0 : index
    %1 = vector.load %arg3[%c0_2, %c0_3, %c0_4] : memref<4x8x32xf32, #tpu.memory_space<vmem>>, vector<4x8x32xf32>
    %cst = arith.constant dense<0.000000e+00> : vector<4x8x8xf32>
    %2 = tpu.matmul %0, %1, %cst {dimension_numbers = #tpu.dot_dimension_numbers<[2], [2], [1], [1], [0, 0, 0, 1, 1, 1], [0], [0]>} : vector<4x8x32xf32>, vector<4x8x32xf32>, vector<4x8x8xf32> -> vector<4x8x8xf32>
    %c0_5 = arith.constant 0 : index
    %c0_6 = arith.constant 0 : index
    %c0_7 = arith.constant 0 : index
    %3 = vector.load %arg4[%c0_5, %c0_6, %c0_7] : memref<4x8x8xf32, #tpu.memory_space<vmem>>, vector<4x8x8xf32>
    tpu.vector_store %arg4[%c0_5, %c0_6, %c0_7], %2 {strides = array<i32>} : memref<4x8x8xf32, #tpu.memory_space<vmem>>, vector<4x8x8xf32>,
    return
  }
  func.func @transform_0(%arg0: i32, %arg1: i32) -> (i32, i32, i32) {
    %c0_i32 = arith.constant 0 : i32
    %c0_i32_0 = arith.constant 0 : i32
    return %arg0, %arg1, %c0_i32 : i32, i32, i32
  }
  func.func @transform_1(%arg0: i32, %arg1: i32) -> (i32, i32, i32) {
    %c0_i32 = arith.constant 0 : i32
    %c0_i32_0 = arith.constant 0 : i32
    %c0_i32_1 = arith.constant 0 : i32
    return %arg0, %c0_i32, %c0_i32_0 : i32, i32, i32
  }
  func.func @transform_2(%arg0: i32, %arg1: i32) -> (i32, i32, i32) {
    %c0_i32 = arith.constant 0 : i32
    %c0_i32_0 = arith.constant 0 : i32
    return %arg0, %arg1, %c0_i32 : i32, i32, i32
  }
}

</mosaic_0001>

<llo_original>
// kernel: tpu_custom_call.1
$region0: #{tpu_custom_call.1}
  #allocation0 [shape = 'u32[]', space=smem, size = 0x4, offset = 0x4, fixed_abs, tag = 'smem constant byte address 0x4 - core index']
  #allocation1 [shape = 'u32[144,128]{1,0:T(1,128)}', space=vmem, size = 0x12000, scoped, tag = 'internal scratch']
  %s0 = inlined_call_operand.hbm [shape: f32[8,8,32], index: 0, kind: input, shape index: {}]
  %s1 = inlined_call_operand.hbm [shape: f32[8,8,32], index: 1, kind: input, shape index: {}]
  %s2 = inlined_call_operand.hbm [shape: f32[8,8,8], index: 2, kind: output, shape index: {}]
  %s3 = sld [smem:[#allocation0]]
  $region49: #{tpu_custom_call.1} parent=0
    _
  %s5 = ssub.s32 1, %s3
  %s6 = scalar_select 0, %s5, %s3
  $region1: #{tpu_custom_call.1} parent=0
    #allocation2 [shape = 'u8[32768]{0}', space=vmem, size = 0x8000, scoped, tag = 'input window, operand 0']
    #allocation3 [shape = 's32[2]{0}', space=sflag, size = 0x8, scoped, tag = 'scoped memory for tpu_custom_call.1']
    #allocation4 [shape = 's32[2]{0}', space=sflag, size = 0x8, scoped, tag = 'scoped memory for tpu_custom_call.1']
    #allocation5 [shape = 'u8[32768]{0}', space=vmem, size = 0x8000, scoped, tag = 'input window, operand 1']
    #allocation6 [shape = 's32[2]{0}', space=sflag, size = 0x8, scoped, tag = 'scoped memory for tpu_custom_call.1']
    #allocation7 [shape = 'u8[32768]{0}', space=vmem, size = 0x8000, scoped, tag = 'output window, operand 0']
    %7 = vsyncpa [#allocation3], 0
    %s8 = scalar_lea.sflag [#allocation3], 1
    %9 = vsyncpa %s8, 0
    %10 = vsyncpa [#allocation6], 0
    %s11 = scalar_lea.sflag [#allocation6], 1
    %12 = vsyncpa %s11, 0
    %13 = vsyncpa [#allocation4], 0
    %s14 = scalar_lea.sflag [#allocation4], 1
    %15 = vsyncpa %s14, 0
    loop: start=0, step=1, limit=4
    $region2: #{tpu_custom_call.1} parent=1 // loop_pre_header
      _
    $region3: #{tpu_custom_call.1} parent=1 // loop_header
      %s17 = sphi 0, %s21
      %p18 = scmp.ge.s32.totalorder %s17, 4
      %s24 = sphi 0, %s36
      %s25 = sphi 0, %s32
      %s26 = sphi 0, %s24
      %s27 = sphi 0, %s25
      %s28 = sphi 0, %s26
      %s29 = sphi 0, %s27
      %s41 = sphi 0, %s43
      %s44 = sphi 0, %s41
      %s45 = sphi 0, %s44
      %s61 = sphi 0, %s45
      %s67 = sphi 0, %s69
      %s70 = sphi 0, %s67
      %s71 = sphi 0, %s70
      %s87 = sphi 0, %s71
      %s95 = sphi 0, %s97
      %s98 = sphi 0, %s95
      %s99 = sphi 0, %s98
      %s115 = sphi 0, %s99
    $region4: #{tpu_custom_call.1} parent=1 // loop_header_branch
      %20 = sbr.rel (%p18) target = $region8
    $region5: #{tpu_custom_call.1} parent=1 // loop_body
      %s22 = ssub.s32 %s17, 1
      %s23 = ssub.s32 %s17, 2
      %s30 = sadd.s32 1, %s25
      %p31 = scmp.ge.s32.totalorder %s30, 1
      %s32 = scalar_select %p31, 0, %s30
      %s33 = sadd.s32 1, %s24
      %s34 = scalar_select %p31, %s33, %s24
      %p35 = scmp.ge.s32.totalorder %s34, 2
      %s36 = scalar_select %p35, 0, %s34
      %s37 = ssub.s32 %s24, %s36
      %s38 = ssub.s32 %s25, %s32
      %s39 = sor.u32 %s37, %s38
      %p40 = scmp.eq.s32.totalorder %s39, 0
      %s42 = sadd.s32 %s41, 1
      %s43 = scalar_select %p40, %s41, %s42
      %p46 = pneg %p40
      %p47 = scmp.eq.s32.totalorder %s17, 1
      %p48 = por %p46, %p47
      %p49 = scmp.ne.s32.totalorder %s41, %s44
      %p50 = scmp.eq.s32.totalorder %s17, 0
      %p51 = por %p49, %p50
      %p52 = scmp.ne.s32.totalorder %s41, %s44
      %p53 = scmp.eq.s32.totalorder %s22, 1
      %p54 = por %p52, %p53
      %p55 = scmp.ne.s32.totalorder %s44, %s45
      %p56 = scmp.eq.s32.totalorder %s22, 0
      %p57 = por %p55, %p56
      %p58 = scmp.ne.s32.totalorder %s44, %s45
      %p59 = scmp.eq.s32.totalorder %s23, 1
      %p60 = por %p58, %p59
      %p62 = scmp.ne.s32.totalorder %s45, %s61
      %p63 = scmp.eq.s32.totalorder %s23, 0
      %p64 = por %p62, %p63
      %s65 = ssub.s32 %s24, %s36
      %p66 = scmp.eq.s32.totalorder %s65, 0
      %s68 = sadd.s32 %s67, 1
      %s69 = scalar_select %p66, %s67, %s68
      %p72 = pneg %p66
      %p73 = scmp.eq.s32.totalorder %s17, 1
      %p74 = por %p72, %p73
      %p75 = scmp.ne.s32.totalorder %s67, %s70
      %p76 = scmp.eq.s32.totalorder %s17, 0
      %p77 = por %p75, %p76
      %p78 = scmp.ne.s32.totalorder %s67, %s70
      %p79 = scmp.eq.s32.totalorder %s22, 1
      %p80 = por %p78, %p79
      %p81 = scmp.ne.s32.totalorder %s70, %s71
      %p82 = scmp.eq.s32.totalorder %s22, 0
      %p83 = por %p81, %p82
      %p84 = scmp.ne.s32.totalorder %s70, %s71
      %p85 = scmp.eq.s32.totalorder %s23, 1
      %p86 = por %p84, %p85
      %p88 = scmp.ne.s32.totalorder %s71, %s87
      %p89 = scmp.eq.s32.totalorder %s23, 0
      %p90 = por %p88, %p89
      %s91 = ssub.s32 %s24, %s36
      %s92 = ssub.s32 %s25, %s32
      %s93 = sor.u32 %s91, %s92
      %p94 = scmp.eq.s32.totalorder %s93, 0
      %s96 = sadd.s32 %s95, 1
      %s97 = scalar_select %p94, %s95, %s96
      %p100 = pneg %p94
      %p101 = scmp.eq.s32.totalorder %s17, 1
      %p102 = por %p100, %p101
      %p103 = scmp.ne.s32.totalorder %s95, %s98
      %p104 = scmp.eq.s32.totalorder %s17, 0
      %p105 = por %p103, %p104
      %p106 = scmp.ne.s32.totalorder %s95, %s98
      %p107 = scmp.eq.s32.totalorder %s22, 1
      %p108 = por %p106, %p107
      %p109 = scmp.ne.s32.totalorder %s98, %s99
      %p110 = scmp.eq.s32.totalorder %s22, 0
      %p111 = por %p109, %p110
      %p112 = scmp.ne.s32.totalorder %s98, %s99
      %p113 = scmp.eq.s32.totalorder %s23, 1
      %p114 = por %p112, %p113
      %p116 = scmp.ne.s32.totalorder %s99, %s115
      %p117 = scmp.eq.s32.totalorder %s23, 0
      %p118 = por %p116, %p117
      %p119 = scmp.le.s32.totalorder 1, %s17
      %p120 = scmp.lt.s32.totalorder %s17, 3
      %p121 = pnand %p119, %p120
      %p122 = pneg %p121
      // Predicated region
      $region9: #{tpu_custom_call.1} parent=5 // pred_check
        _
      $region10: #{tpu_custom_call.1} parent=5 // pred_check_branch
        %124 = sbr.rel (%p121) target = $region12
      $region11: #{tpu_custom_call.1} parent=5 // pred_region
        %s125 = ssub.s32 %s17, 1
      $region12: #{tpu_custom_call.1} parent=5 // pred_fallthru
        _
      %p126 = scmp.lt.s32.totalorder %s17, 2
      // Predicated region
      $region13: #{tpu_custom_call.1} parent=5 // pred_check
        %p127 = pneg %p126
      $region14: #{tpu_custom_call.1} parent=5 // pred_check_branch
        %129 = sbr.rel (%p127) target = $region16
      $region15: #{tpu_custom_call.1} parent=5 // pred_region
        // Predicated region
        $region17: #{tpu_custom_call.1} parent=15 // pred_check
          %p130 = pneg %p51
        $region18: #{tpu_custom_call.1} parent=15 // pred_check_branch
          %132 = sbr.rel (%p130) target = $region20
        $region19: #{tpu_custom_call.1} parent=15 // pred_region
          %s133 = sand.u32 %s41, 1
          %s134 = scalar_lea.sflag [#allocation3], %s133
          %s135 = sand.u32 %s41, 1
          %s136 = smul.addr %s135, 32
          %s137 = scalar_lea.vmem [#allocation2], %s136
          %s138 = smul.u32 4, %s24
          %s140 = ssub.s32 512, 512
          %141 = vsyncadd %s134, %s140
          %s142 = sadd.s32 %s25, %s138
          %s143 = smul.addr %s142, 128
          %s144 = scalar_lea.hbm %s0, %s143
          %s145 = sshll.u32 %s137, 4
          %s146 = int_to_ptr.vmem [resolvable:$true] %s145
          %151 = dma.hbm_to_vmem [thread:$0]  %s144, 512, %s146, %s134, 128, 128, 8
        $region20: #{tpu_custom_call.1} parent=15 // pred_fallthru
          _
        // Predicated region
        $region21: #{tpu_custom_call.1} parent=15 // pred_check
          %p152 = pneg %p77
        $region22: #{tpu_custom_call.1} parent=15 // pred_check_branch
          %154 = sbr.rel (%p152) target = $region24
        $region23: #{tpu_custom_call.1} parent=15 // pred_region
          %s155 = sand.u32 %s67, 1
          %s156 = scalar_lea.sflag [#allocation6], %s155
          %s157 = sand.u32 %s67, 1
          %s158 = smul.addr %s157, 32
          %s159 = scalar_lea.vmem [#allocation5], %s158
          %s160 = smul.u32 4, %s24
          %s162 = ssub.s32 512, 512
          %163 = vsyncadd %s156, %s162
          %s164 = smul.addr %s160, 128
          %s165 = scalar_lea.hbm %s1, %s164
          %s166 = sshll.u32 %s159, 4
          %s167 = int_to_ptr.vmem [resolvable:$true] %s166
          %172 = dma.hbm_to_vmem [thread:$0]  %s165, 512, %s167, %s156, 128, 128, 8
        $region24: #{tpu_custom_call.1} parent=15 // pred_fallthru
          _
      $region16: #{tpu_custom_call.1} parent=5 // pred_fallthru
        _
      %p173 = scmp.le.s32.totalorder 1, %s17
      %p174 = scmp.lt.s32.totalorder %s17, 3
      %p175 = pnand %p173, %p174
      %p176 = pneg %p175
      // Predicated region
      $region25: #{tpu_custom_call.1} parent=5 // pred_check
        _
      $region26: #{tpu_custom_call.1} parent=5 // pred_check_branch
        %178 = sbr.rel (%p175) target = $region28
      $region27: #{tpu_custom_call.1} parent=5 // pred_region
        %s179 = ssub.s32 %s17, 1
        %s180 = sand.u32 %s44, 1
        %s181 = scalar_lea.sflag [#allocation3], %s180
        %s182 = sand.u32 %s44, 1
        %s183 = smul.addr %s182, 32
        %s184 = scalar_lea.vmem [#allocation2], %s183
        // Predicated region
        $region29: #{tpu_custom_call.1} parent=27 // pred_check
          %p185 = pneg %p57
        $region30: #{tpu_custom_call.1} parent=27 // pred_check_branch
          %187 = sbr.rel (%p185) target = $region32
        $region31: #{tpu_custom_call.1} parent=27 // pred_region
          %188 = dma.done %s181, 512
        $region32: #{tpu_custom_call.1} parent=27 // pred_fallthru
          _
        %s189 = sand.u32 %s70, 1
        %s190 = scalar_lea.sflag [#allocation6], %s189
        %s191 = sand.u32 %s70, 1
        %s192 = smul.addr %s191, 32
        %s193 = scalar_lea.vmem [#allocation5], %s192
        // Predicated region
        $region33: #{tpu_custom_call.1} parent=27 // pred_check
          %p194 = pneg %p83
        $region34: #{tpu_custom_call.1} parent=27 // pred_check_branch
          %196 = sbr.rel (%p194) target = $region36
        $region35: #{tpu_custom_call.1} parent=27 // pred_region
          %197 = dma.done %s190, 512
        $region36: #{tpu_custom_call.1} parent=27 // pred_fallthru
          _
        %s198 = sand.u32 %s44, 1
        %s199 = scalar_lea.sflag [#allocation3], %s198
        %s200 = sand.u32 %s44, 1
        %s201 = smul.addr %s200, 32
        %s202 = scalar_lea.vmem [#allocation2], %s201
        %p203 = pneg %p57
        %p204 = pneg %p54
        %s205 = sand.u32 %s70, 1
        %s206 = scalar_lea.sflag [#allocation6], %s205
        %s207 = sand.u32 %s70, 1
        %s208 = smul.addr %s207, 32
        %s209 = scalar_lea.vmem [#allocation5], %s208
        %p210 = pneg %p83
        %p211 = pneg %p80
        %p212 = pneg %p111
        %p213 = pneg %p108
        %s214 = sand.u32 %s98, 1
        %s215 = scalar_lea.sflag [#allocation4], %s214
        %s216 = sand.u32 %s98, 1
        %s217 = smul.addr %s216, 32
        %s218 = scalar_lea.vmem [#allocation7], %s217
        %s219 = smul.u32 4, %s26
        %s220 = smul.u32 4, %s26
        %s221 = smul.u32 4, %s26
        %v222 = vld [vmem:[%s184] sm:$0xff]
        %v223 = vld [vmem:[%s184 + $0x8] sm:$0xff]
        %v224 = vld [vmem:[%s184 + $0x10] sm:$0xff]
        %v225 = vld [vmem:[%s184 + $0x18] sm:$0xff]
        %v226 = vld [vmem:[%s193] sm:$0xff]
        %v227 = vld [vmem:[%s193 + $0x8] sm:$0xff]
        %v228 = vld [vmem:[%s193 + $0x10] sm:$0xff]
        %v229 = vld [vmem:[%s193 + $0x18] sm:$0xff]
        %vm230 = vcmask 261120
        %v232 = vsel %vm230, %v222, 0
        %v235 = vsel %vm230, %v226, 0
        %237 = vmatprep.subr.mxu0 0.0
        %238 = vmatpush1.xpose.msra.mxu0 0.0
        %239 = vmatprep.subr.mxu0 0.0
        %240 = vmatpush1.xpose.msra.mxu0 0.0
        %241 = vmatprep.subr.mxu0 0.0
        %242 = vmatpush1.xpose.msra.mxu0 0.0
        %243 = vmatprep.subr.mxu0 0.0
        %244 = vmatpush1.xpose.msra.mxu0 0.0
        %245 = vmatprep.subr.mxu0 0.0
        %246 = vmatpush1.xpose.msra.mxu0 0.0
        %247 = vmatprep.subr.mxu0 0.0
        %248 = vmatpush1.xpose.msra.mxu0 0.0
        %249 = vmatprep.subr.mxu0 0.0
        %250 = vmatpush1.xpose.msra.mxu0 0.0
        %251 = vmatprep.subr.mxu0 0.0
        %252 = vmatpush1.xpose.msra.mxu0 0.0
        %253 = vmatprep.subr.mxu0 0.0
        %254 = vmatpush1.xpose.msra.mxu0 0.0
        %255 = vmatprep.subr.mxu0 0.0
        %256 = vmatpush1.xpose.msra.mxu0 0.0
        %257 = vmatprep.subr.mxu0 0.0
        %258 = vmatpush1.xpose.msra.mxu0 0.0
        %259 = vmatprep.subr.mxu0 0.0
        %260 = vmatpush1.xpose.msra.mxu0 0.0
        %261 = vmatprep.subr.mxu0 0.0
        %262 = vmatpush1.xpose.msra.mxu0 0.0
        %263 = vmatprep.subr.mxu0 0.0
        %264 = vmatpush1.xpose.msra.mxu0 0.0
        %265 = vmatprep.subr.mxu0 0.0
        %266 = vmatpush1.xpose.msra.mxu0 0.0
        %267 = vmatprep.subr.mxu0 0.0
        %268 = vmatpush1.xpose.msra.mxu0 %v235
        %269 = vmatprep.subr.mxu0 0.0
        %270 = vmatpush2.xpose.msra.mxu0 0.0
        %271 = vmatprep.subr.mxu0 0.0
        %272 = vmatpush2.xpose.msra.mxu0 0.0
        %273 = vmatprep.subr.mxu0 0.0
        %274 = vmatpush2.xpose.msra.mxu0 0.0
        %275 = vmatprep.subr.mxu0 0.0
        %276 = vmatpush2.xpose.msra.mxu0 0.0
        %277 = vmatprep.subr.mxu0 0.0
        %278 = vmatpush2.xpose.msra.mxu0 0.0
        %279 = vmatprep.subr.mxu0 0.0
        %280 = vmatpush2.xpose.msra.mxu0 0.0
        %281 = vmatprep.subr.mxu0 0.0
        %282 = vmatpush2.xpose.msra.mxu0 0.0
        %283 = vmatprep.subr.mxu0 0.0
        %284 = vmatpush2.xpose.msra.mxu0 0.0
        %285 = vmatprep.subr.mxu0 0.0
        %286 = vmatpush2.xpose.msra.mxu0 0.0
        %287 = vmatprep.subr.mxu0 0.0
        %288 = vmatpush2.xpose.msra.mxu0 0.0
        %289 = vmatprep.subr.mxu0 0.0
        %290 = vmatpush2.xpose.msra.mxu0 0.0
        %291 = vmatprep.subr.mxu0 0.0
        %292 = vmatpush2.xpose.msra.mxu0 0.0
        %293 = vmatprep.subr.mxu0 0.0
        %294 = vmatpush2.xpose.msra.mxu0 0.0
        %295 = vmatprep.subr.mxu0 0.0
        %296 = vmatpush2.xpose.msra.mxu0 0.0
        %297 = vmatprep.subr.mxu0 0.0
        %298 = vmatpush2.xpose.msra.mxu0 0.0
        %299 = vmatprep.subr.mxu0 0.0
        %300 = vmatpush2.xpose.msra.mxu0 0.0
        %301 = vmatprep.mubr.f32.mxu0 0.0
        %302 = vmatmul.mubr.f32.gmra.mxu0 %v232
        %v303 = vpop.f32.mrf.mxu0
        %v304 = vadd.f32 0.0, %v303
        %v305 = vpop.f32.mrf.mxu0
        %306 = vdwg.mxu0
        %v308 = vsel %vm230, %v223, 0
        %v311 = vsel %vm230, %v227, 0
        %313 = vmatprep.subr.mxu0 0.0
        %314 = vmatpush1.xpose.msra.mxu0 0.0
        %315 = vmatprep.subr.mxu0 0.0
        %316 = vmatpush1.xpose.msra.mxu0 0.0
        %317 = vmatprep.subr.mxu0 0.0
        %318 = vmatpush1.xpose.msra.mxu0 0.0
        %319 = vmatprep.subr.mxu0 0.0
        %320 = vmatpush1.xpose.msra.mxu0 0.0
        %321 = vmatprep.subr.mxu0 0.0
        %322 = vmatpush1.xpose.msra.mxu0 0.0
        %323 = vmatprep.subr.mxu0 0.0
        %324 = vmatpush1.xpose.msra.mxu0 0.0
        %325 = vmatprep.subr.mxu0 0.0
        %326 = vmatpush1.xpose.msra.mxu0 0.0
        %327 = vmatprep.subr.mxu0 0.0
        %328 = vmatpush1.xpose.msra.mxu0 0.0
        %329 = vmatprep.subr.mxu0 0.0
        %330 = vmatpush1.xpose.msra.mxu0 0.0
        %331 = vmatprep.subr.mxu0 0.0
        %332 = vmatpush1.xpose.msra.mxu0 0.0
        %333 = vmatprep.subr.mxu0 0.0
        %334 = vmatpush1.xpose.msra.mxu0 0.0
        %335 = vmatprep.subr.mxu0 0.0
        %336 = vmatpush1.xpose.msra.mxu0 0.0
        %337 = vmatprep.subr.mxu0 0.0
        %338 = vmatpush1.xpose.msra.mxu0 0.0
        %339 = vmatprep.subr.mxu0 0.0
        %340 = vmatpush1.xpose.msra.mxu0 0.0
        %341 = vmatprep.subr.mxu0 0.0
        %342 = vmatpush1.xpose.msra.mxu0 0.0
        %343 = vmatprep.subr.mxu0 0.0
        %344 = vmatpush1.xpose.msra.mxu0 %v311
        %345 = vmatprep.subr.mxu0 0.0
        %346 = vmatpush2.xpose.msra.mxu0 0.0
        %347 = vmatprep.subr.mxu0 0.0
        %348 = vmatpush2.xpose.msra.mxu0 0.0
        %349 = vmatprep.subr.mxu0 0.0
        %350 = vmatpush2.xpose.msra.mxu0 0.0
        %351 = vmatprep.subr.mxu0 0.0
        %352 = vmatpush2.xpose.msra.mxu0 0.0
        %353 = vmatprep.subr.mxu0 0.0
        %354 = vmatpush2.xpose.msra.mxu0 0.0
        %355 = vmatprep.subr.mxu0 0.0
        %356 = vmatpush2.xpose.msra.mxu0 0.0
        %357 = vmatprep.subr.mxu0 0.0
        %358 = vmatpush2.xpose.msra.mxu0 0.0
        %359 = vmatprep.subr.mxu0 0.0
        %360 = vmatpush2.xpose.msra.mxu0 0.0
        %361 = vmatprep.subr.mxu0 0.0
        %362 = vmatpush2.xpose.msra.mxu0 0.0
        %363 = vmatprep.subr.mxu0 0.0
        %364 = vmatpush2.xpose.msra.mxu0 0.0
        %365 = vmatprep.subr.mxu0 0.0
        %366 = vmatpush2.xpose.msra.mxu0 0.0
        %367 = vmatprep.subr.mxu0 0.0
        %368 = vmatpush2.xpose.msra.mxu0 0.0
        %369 = vmatprep.subr.mxu0 0.0
        %370 = vmatpush2.xpose.msra.mxu0 0.0
        %371 = vmatprep.subr.mxu0 0.0
        %372 = vmatpush2.xpose.msra.mxu0 0.0
        %373 = vmatprep.subr.mxu0 0.0
        %374 = vmatpush2.xpose.msra.mxu0 0.0
        %375 = vmatprep.subr.mxu0 0.0
        %376 = vmatpush2.xpose.msra.mxu0 0.0
        %377 = vmatprep.mubr.f32.mxu0 0.0
        %378 = vmatmul.mubr.f32.gmra.mxu0 %v308
        %v379 = vpop.f32.mrf.mxu0
        %v380 = vadd.f32 0.0, %v379
        %v381 = vpop.f32.mrf.mxu0
        %382 = vdwg.mxu0
        %v384 = vsel %vm230, %v224, 0
        %v387 = vsel %vm230, %v228, 0
        %389 = vmatprep.subr.mxu0 0.0
        %390 = vmatpush1.xpose.msra.mxu0 0.0
        %391 = vmatprep.subr.mxu0 0.0
        %392 = vmatpush1.xpose.msra.mxu0 0.0
        %393 = vmatprep.subr.mxu0 0.0
        %394 = vmatpush1.xpose.msra.mxu0 0.0
        %395 = vmatprep.subr.mxu0 0.0
        %396 = vmatpush1.xpose.msra.mxu0 0.0
        %397 = vmatprep.subr.mxu0 0.0
        %398 = vmatpush1.xpose.msra.mxu0 0.0
        %399 = vmatprep.subr.mxu0 0.0
        %400 = vmatpush1.xpose.msra.mxu0 0.0
        %401 = vmatprep.subr.mxu0 0.0
        %402 = vmatpush1.xpose.msra.mxu0 0.0
        %403 = vmatprep.subr.mxu0 0.0
        %404 = vmatpush1.xpose.msra.mxu0 0.0
        %405 = vmatprep.subr.mxu0 0.0
        %406 = vmatpush1.xpose.msra.mxu0 0.0
        %407 = vmatprep.subr.mxu0 0.0
        %408 = vmatpush1.xpose.msra.mxu0 0.0
        %409 = vmatprep.subr.mxu0 0.0
        %410 = vmatpush1.xpose.msra.mxu0 0.0
        %411 = vmatprep.subr.mxu0 0.0
        %412 = vmatpush1.xpose.msra.mxu0 0.0
        %413 = vmatprep.subr.mxu0 0.0
        %414 = vmatpush1.xpose.msra.mxu0 0.0
        %415 = vmatprep.subr.mxu0 0.0
        %416 = vmatpush1.xpose.msra.mxu0 0.0
        %417 = vmatprep.subr.mxu0 0.0
        %418 = vmatpush1.xpose.msra.mxu0 0.0
        %419 = vmatprep.subr.mxu0 0.0
        %420 = vmatpush1.xpose.msra.mxu0 %v387
        %421 = vmatprep.subr.mxu0 0.0
        %422 = vmatpush2.xpose.msra.mxu0 0.0
        %423 = vmatprep.subr.mxu0 0.0
        %424 = vmatpush2.xpose.msra.mxu0 0.0
        %425 = vmatprep.subr.mxu0 0.0
        %426 = vmatpush2.xpose.msra.mxu0 0.0
        %427 = vmatprep.subr.mxu0 0.0
        %428 = vmatpush2.xpose.msra.mxu0 0.0
        %429 = vmatprep.subr.mxu0 0.0
        %430 = vmatpush2.xpose.msra.mxu0 0.0
        %431 = vmatprep.subr.mxu0 0.0
        %432 = vmatpush2.xpose.msra.mxu0 0.0
        %433 = vmatprep.subr.mxu0 0.0
        %434 = vmatpush2.xpose.msra.mxu0 0.0
        %435 = vmatprep.subr.mxu0 0.0
        %436 = vmatpush2.xpose.msra.mxu0 0.0
        %437 = vmatprep.subr.mxu0 0.0
        %438 = vmatpush2.xpose.msra.mxu0 0.0
        %439 = vmatprep.subr.mxu0 0.0
        %440 = vmatpush2.xpose.msra.mxu0 0.0
        %441 = vmatprep.subr.mxu0 0.0
        %442 = vmatpush2.xpose.msra.mxu0 0.0
        %443 = vmatprep.subr.mxu0 0.0
        %444 = vmatpush2.xpose.msra.mxu0 0.0
        %445 = vmatprep.subr.mxu0 0.0
        %446 = vmatpush2.xpose.msra.mxu0 0.0
        %447 = vmatprep.subr.mxu0 0.0
        %448 = vmatpush2.xpose.msra.mxu0 0.0
        %449 = vmatprep.subr.mxu0 0.0
        %450 = vmatpush2.xpose.msra.mxu0 0.0
        %451 = vmatprep.subr.mxu0 0.0
        %452 = vmatpush2.xpose.msra.mxu0 0.0
        %453 = vmatprep.mubr.f32.mxu0 0.0
        %454 = vmatmul.mubr.f32.gmra.mxu0 %v384
        %v455 = vpop.f32.mrf.mxu0
        %v456 = vadd.f32 0.0, %v455
        %v457 = vpop.f32.mrf.mxu0
        %458 = vdwg.mxu0
        %v460 = vsel %vm230, %v225, 0
        %v463 = vsel %vm230, %v229, 0
        %465 = vmatprep.subr.mxu0 0.0
        %466 = vmatpush1.xpose.msra.mxu0 0.0
        %467 = vmatprep.subr.mxu0 0.0
        %468 = vmatpush1.xpose.msra.mxu0 0.0
        %469 = vmatprep.subr.mxu0 0.0
        %470 = vmatpush1.xpose.msra.mxu0 0.0
        %471 = vmatprep.subr.mxu0 0.0
        %472 = vmatpush1.xpose.msra.mxu0 0.0
        %473 = vmatprep.subr.mxu0 0.0
        %474 = vmatpush1.xpose.msra.mxu0 0.0
        %475 = vmatprep.subr.mxu0 0.0
        %476 = vmatpush1.xpose.msra.mxu0 0.0
        %477 = vmatprep.subr.mxu0 0.0
        %478 = vmatpush1.xpose.msra.mxu0 0.0
        %479 = vmatprep.subr.mxu0 0.0
        %480 = vmatpush1.xpose.msra.mxu0 0.0
        %481 = vmatprep.subr.mxu0 0.0
        %482 = vmatpush1.xpose.msra.mxu0 0.0
        %483 = vmatprep.subr.mxu0 0.0
        %484 = vmatpush1.xpose.msra.mxu0 0.0
        %485 = vmatprep.subr.mxu0 0.0
        %486 = vmatpush1.xpose.msra.mxu0 0.0
        %487 = vmatprep.subr.mxu0 0.0
        %488 = vmatpush1.xpose.msra.mxu0 0.0
        %489 = vmatprep.subr.mxu0 0.0
        %490 = vmatpush1.xpose.msra.mxu0 0.0
        %491 = vmatprep.subr.mxu0 0.0
        %492 = vmatpush1.xpose.msra.mxu0 0.0
        %493 = vmatprep.subr.mxu0 0.0
        %494 = vmatpush1.xpose.msra.mxu0 0.0
        %495 = vmatprep.subr.mxu0 0.0
        %496 = vmatpush1.xpose.msra.mxu0 %v463
        %497 = vmatprep.subr.mxu0 0.0
        %498 = vmatpush2.xpose.msra.mxu0 0.0
        %499 = vmatprep.subr.mxu0 0.0
        %500 = vmatpush2.xpose.msra.mxu0 0.0
        %501 = vmatprep.subr.mxu0 0.0
        %502 = vmatpush2.xpose.msra.mxu0 0.0
        %503 = vmatprep.subr.mxu0 0.0
        %504 = vmatpush2.xpose.msra.mxu0 0.0
        %505 = vmatprep.subr.mxu0 0.0
        %506 = vmatpush2.xpose.msra.mxu0 0.0
        %507 = vmatprep.subr.mxu0 0.0
        %508 = vmatpush2.xpose.msra.mxu0 0.0
        %509 = vmatprep.subr.mxu0 0.0
        %510 = vmatpush2.xpose.msra.mxu0 0.0
        %511 = vmatprep.subr.mxu0 0.0
        %512 = vmatpush2.xpose.msra.mxu0 0.0
        %513 = vmatprep.subr.mxu0 0.0
        %514 = vmatpush2.xpose.msra.mxu0 0.0
        %515 = vmatprep.subr.mxu0 0.0
        %516 = vmatpush2.xpose.msra.mxu0 0.0
        %517 = vmatprep.subr.mxu0 0.0
        %518 = vmatpush2.xpose.msra.mxu0 0.0
        %519 = vmatprep.subr.mxu0 0.0
        %520 = vmatpush2.xpose.msra.mxu0 0.0
        %521 = vmatprep.subr.mxu0 0.0
        %522 = vmatpush2.xpose.msra.mxu0 0.0
        %523 = vmatprep.subr.mxu0 0.0
        %524 = vmatpush2.xpose.msra.mxu0 0.0
        %525 = vmatprep.subr.mxu0 0.0
        %526 = vmatpush2.xpose.msra.mxu0 0.0
        %527 = vmatprep.subr.mxu0 0.0
        %528 = vmatpush2.xpose.msra.mxu0 0.0
        %529 = vmatprep.mubr.f32.mxu0 0.0
        %530 = vmatmul.mubr.f32.gmra.mxu0 %v460
        %v531 = vpop.f32.mrf.mxu0
        %v532 = vadd.f32 0.0, %v531
        %v533 = vpop.f32.mrf.mxu0
        %534 = vdwg.mxu0
        %vm535 = vcmask 64512
        %536 = vst.msk [vmem:[%s218] sm:$0xff] %vm535, %v304
        %537 = vst.msk [vmem:[%s218 + $0x8] sm:$0xff] %vm535, %v380
        %538 = vst.msk [vmem:[%s218 + $0x10] sm:$0xff] %vm535, %v456
        %539 = vst.msk [vmem:[%s218 + $0x18] sm:$0xff] %vm535, %v532
        %s540 = sand.u32 %s98, 1
        %s541 = scalar_lea.sflag [#allocation4], %s540
        %s542 = sand.u32 %s98, 1
        %s543 = smul.addr %s542, 32
        %s544 = scalar_lea.vmem [#allocation7], %s543
        // Predicated region
        $region37: #{tpu_custom_call.1} parent=27 // pred_check
          %p545 = pneg %p108
        $region38: #{tpu_custom_call.1} parent=27 // pred_check_branch
          %547 = sbr.rel (%p545) target = $region40
        $region39: #{tpu_custom_call.1} parent=27 // pred_region
          %s548 = smul.u32 4, %s26
          %s550 = ssub.s32 512, 512
          %551 = vsyncadd %s541, %s550
          %s552 = sadd.s32 %s27, %s548
          %s553 = smul.addr %s552, 128
          %s554 = scalar_lea.hbm %s2, %s553
          %s555 = sshll.u32 %s544, 4
          %s556 = int_to_ptr.vmem [resolvable:$true] %s555
          %561 = dma.vmem_to_hbm [thread:$0]  %s556, 512, %s554, %s541, 128, 128, 8
        $region40: #{tpu_custom_call.1} parent=27 // pred_fallthru
          _
      $region28: #{tpu_custom_call.1} parent=5 // pred_fallthru
        _
      %p562 = scmp.le.s32.totalorder 2, %s17
      // Predicated region
      $region41: #{tpu_custom_call.1} parent=5 // pred_check
        %p563 = pneg %p562
      $region42: #{tpu_custom_call.1} parent=5 // pred_check_branch
        %565 = sbr.rel (%p563) target = $region44
      $region43: #{tpu_custom_call.1} parent=5 // pred_region
        %s566 = ssub.s32 %s17, 2
        // Predicated region
        $region45: #{tpu_custom_call.1} parent=43 // pred_check
          %p567 = pneg %p114
        $region46: #{tpu_custom_call.1} parent=43 // pred_check_branch
          %569 = sbr.rel (%p567) target = $region48
        $region47: #{tpu_custom_call.1} parent=43 // pred_region
          %s570 = sand.u32 %s99, 1
          %s571 = scalar_lea.sflag [#allocation4], %s570
          %s572 = sand.u32 %s99, 1
          %s573 = smul.addr %s572, 32
          %s574 = scalar_lea.vmem [#allocation7], %s573
          %575 = dma.done %s571, 512
        $region48: #{tpu_custom_call.1} parent=43 // pred_fallthru
          _
      $region44: #{tpu_custom_call.1} parent=5 // pred_fallthru
        _
    $region6: #{tpu_custom_call.1} parent=1 // loop_footer
      %s21 = sadd.s32 1, %s17
    $region7: #{tpu_custom_call.1} parent=1 // loop_footer_branch
      %16 = sbr.rel target = $region3
    $region8: #{tpu_custom_call.1} parent=1 // loop_exit
      _
    %576 = vsyncpa [#allocation3], 1
    %s577 = scalar_lea.sflag [#allocation3], 1
    %578 = vsyncpa %s577, 1
    %579 = vsyncpa [#allocation6], 1
    %s580 = scalar_lea.sflag [#allocation6], 1
    %581 = vsyncpa %s580, 1
    %582 = vsyncpa [#allocation4], 1
    %s583 = scalar_lea.sflag [#allocation4], 1
    %584 = vsyncpa %s583, 1

</llo_original>
